<compile_context>
chip_gen: v5e
topology: v5e:2x2
jax: 0.10.0
libtpu: 0.0.40
codegen_flags: <defaults>
</compile_context>

<pallas_src>
import jax
import jax.numpy as jnp
from jax.experimental import pallas as pl
from jax.experimental.pallas import tpu as pltpu


def dnn_kernel(p_ref, x_ref, o_ref):
    # p_ref: (5,) f32 in SMEM: [dw0, dw1, dw2, dw3, db]  (dw = w[:,1]-w[:,0])
    # x_ref: (4, TILE_ROWS, 128) f32 in VMEM  (feature, row, lane)
    # o_ref: (2, TILE_ROWS, 128) f32 in VMEM  (class,   row, lane)
    d = (x_ref[0] * p_ref[0]
         + x_ref[1] * p_ref[1]
         + x_ref[2] * p_ref[2]
         + x_ref[3] * p_ref[3]
         + p_ref[4])
    # 2-class softmax == sigmoid of the logit difference (EUP transcendental).
    p1 = jax.nn.sigmoid(d)
    o_ref[1] = p1
    o_ref[0] = 1.0 - p1


def dnn_forward(x, w, b, max_tile_rows=2048):
    """x: (B, 4) f32, w: (4, 2) f32 (in, out), b: (2,) f32 -> (B, 2) probs.

    NOTE: a PyTorch nn.Linear stores weight as (out, in); transpose it before
    calling (w_here = torch_weight.T).
    """
    B = x.shape[0]

    # ---- layout: (B,4) -> (4, ROWS, 128), rows padded to the tile ----------
    rows_needed = pl.cdiv(B, 128)
    tile_rows = min(max_tile_rows, pl.cdiv(rows_needed, 8) * 8)  # multiple of 8
    rows_pad = pl.cdiv(rows_needed, tile_rows) * tile_rows
    b_pad = rows_pad * 128

    xt = x.astype(jnp.float32).T                      # (4, B)
    if b_pad != B:
        xt = jnp.pad(xt, ((0, 0), (0, b_pad - B)))
    xt = xt.reshape(4, rows_pad, 128)                 # free row-major reshape

    # ---- fold the two logits into a single difference (5 SMEM scalars) -----
    w = w.astype(jnp.float32)
    b = b.astype(jnp.float32)
    params = jnp.concatenate([w[:, 1] - w[:, 0], (b[1] - b[0])[None]])  # (5,)

    grid = (rows_pad // tile_rows,)
    cost = pl.CostEstimate(
        flops=9 * b_pad,               # 4 mul + 4 add + 1 sub per column
        transcendentals=b_pad,         # one sigmoid per column
        bytes_accessed=(4 + 2) * 4 * b_pad,
    )

    out3 = pl.pallas_call(
        dnn_kernel,
        out_shape=jax.ShapeDtypeStruct((2, rows_pad, 128), jnp.float32),
        grid=grid,
        in_specs=[
            pl.BlockSpec(memory_space=pltpu.SMEM),                 # params
            pl.BlockSpec((4, tile_rows, 128), lambda i: (0, i, 0)),  # x tile
        ],
        out_specs=pl.BlockSpec((2, tile_rows, 128), lambda i: (0, i, 0)),
        compiler_params=pltpu.CompilerParams(
            dimension_semantics=("parallel",),
        ),
        cost_estimate=cost,
    )(params, xt)

    return out3.reshape(2, b_pad)[:, :B].T            # back to (B, 2)


if __name__ == "__main__":
    key = jax.random.PRNGKey(0)
    k_x, k_w, k_b = jax.random.split(key, 3)

    B, IN, OUT = 8, 4, 2
    # PyTorch-style init: U(-1/sqrt(in), 1/sqrt(in)).
    bound = 1.0 / jnp.sqrt(jnp.float32(IN))
    w = jax.random.uniform(k_w, (IN, OUT), jnp.float32, -bound, bound)
    b = jax.random.uniform(k_b, (OUT,), jnp.float32, -bound, bound)
    x = jax.random.normal(k_x, (B, IN), jnp.float32)

    out = dnn_forward(x, w, b)
    out = jax.block_until_ready(out)

    # Reference forward pass in plain JAX.
    ref = jax.nn.softmax(x @ w + b, axis=1)
    assert out.shape == (B, OUT)
    assert jnp.allclose(out, ref, atol=1e-5, rtol=1e-5)

    print("KERNEL_OK")
</pallas_src>

<mosaic_0001>
module attributes {stable_mosaic.version = 11 : i64} {
  func.func @dnn_kernel(%arg0: i32, %arg1: memref<5xf32, #tpu.memory_space<smem>>, %arg2: memref<4x8x128xf32, #tpu.memory_space<vmem>>, %arg3: memref<2x8x128xf32, #tpu.memory_space<vmem>>) attributes {dimension_semantics = [#tpu.dimension_semantics<parallel>], iteration_bounds = array<i64: 1>, scalar_prefetch = 0 : i64, scratch_operands = 0 : i64, tpu.core_type = #tpu.core_type<tc>, window_params = [{transform_indices = @transform_0, window_bounds = array<i64: 5>}, {transform_indices = @transform_1, window_bounds = array<i64: 4, 8, 128>}, {transform_indices = @transform_2, window_bounds = array<i64: 2, 8, 128>}]} {
    %c0 = arith.constant 0 : index
    %c0_0 = arith.constant 0 : index
    %c0_1 = arith.constant 0 : index
    %0 = vector.load %arg2[%c0, %c0_0, %c0_1] : memref<4x8x128xf32, #tpu.memory_space<vmem>>, vector<1x8x128xf32>
    %1 = vector.shape_cast %0 : vector<1x8x128xf32> to vector<8x128xf32>
    %c0_2 = arith.constant 0 : index
    %2 = memref.load %arg1[%c0_2] : memref<5xf32, #tpu.memory_space<smem>>
    %3 = vector.broadcast %2 : f32 to vector<8x128xf32>
    %4 = arith.mulf %1, %3 : vector<8x128xf32>
    %c1 = arith.constant 1 : index
    %c0_3 = arith.constant 0 : index
    %c0_4 = arith.constant 0 : index
    %5 = vector.load %arg2[%c1, %c0_3, %c0_4] : memref<4x8x128xf32, #tpu.memory_space<vmem>>, vector<1x8x128xf32>
    %6 = vector.shape_cast %5 : vector<1x8x128xf32> to vector<8x128xf32>
    %c1_5 = arith.constant 1 : index
    %7 = memref.load %arg1[%c1_5] : memref<5xf32, #tpu.memory_space<smem>>
    %8 = vector.broadcast %7 : f32 to vector<8x128xf32>
    %9 = arith.mulf %6, %8 : vector<8x128xf32>
    %10 = arith.addf %4, %9 : vector<8x128xf32>
    %c2 = arith.constant 2 : index
    %c0_6 = arith.constant 0 : index
    %c0_7 = arith.constant 0 : index
    %11 = vector.load %arg2[%c2, %c0_6, %c0_7] : memref<4x8x128xf32, #tpu.memory_space<vmem>>, vector<1x8x128xf32>
    %12 = vector.shape_cast %11 : vector<1x8x128xf32> to vector<8x128xf32>
    %c2_8 = arith.constant 2 : index
    %13 = memref.load %arg1[%c2_8] : memref<5xf32, #tpu.memory_space<smem>>
    %14 = vector.broadcast %13 : f32 to vector<8x128xf32>
    %15 = arith.mulf %12, %14 : vector<8x128xf32>
    %16 = arith.addf %10, %15 : vector<8x128xf32>
    %c3 = arith.constant 3 : index
    %c0_9 = arith.constant 0 : index
    %c0_10 = arith.constant 0 : index
    %17 = vector.load %arg2[%c3, %c0_9, %c0_10] : memref<4x8x128xf32, #tpu.memory_space<vmem>>, vector<1x8x128xf32>
    %18 = vector.shape_cast %17 : vector<1x8x128xf32> to vector<8x128xf32>
    %c3_11 = arith.constant 3 : index
    %19 = memref.load %arg1[%c3_11] : memref<5xf32, #tpu.memory_space<smem>>
    %20 = vector.broadcast %19 : f32 to vector<8x128xf32>
    %21 = arith.mulf %18, %20 : vector<8x128xf32>
    %22 = arith.addf %16, %21 : vector<8x128xf32>
    %c4 = arith.constant 4 : index
    %23 = memref.load %arg1[%c4] : memref<5xf32, #tpu.memory_space<smem>>
    %24 = vector.broadcast %23 : f32 to vector<8x128xf32>
    %25 = arith.addf %22, %24 : vector<8x128xf32>
    %26 = arith.negf %25 : vector<8x128xf32>
    %27 = math.exp %26 : vector<8x128xf32>
    %cst = arith.constant 1.000000e+00 : f32
    %28 = vector.broadcast %cst : f32 to vector<8x128xf32>
    %29 = arith.addf %28, %27 : vector<8x128xf32>
    %30 = arith.divf %28, %29 : vector<8x128xf32>
    %c1_12 = arith.constant 1 : index
    %c0_13 = arith.constant 0 : index
    %c0_14 = arith.constant 0 : index
    %31 = vector.load %arg3[%c1_12, %c0_13, %c0_14] : memref<2x8x128xf32, #tpu.memory_space<vmem>>, vector<1x8x128xf32>
    %32 = vector.shape_cast %31 : vector<1x8x128xf32> to vector<8x128xf32>
    %33 = vector.shape_cast %30 : vector<8x128xf32> to vector<1x8x128xf32>
    tpu.vector_store %arg3[%c1_12, %c0_13, %c0_14], %33 {strides = array<i32>} : memref<2x8x128xf32, #tpu.memory_space<vmem>>, vector<1x8x128xf32>,
    %cst_15 = arith.constant 1.000000e+00 : f32
    %34 = vector.broadcast %cst_15 : f32 to vector<8x128xf32>
    %35 = arith.subf %34, %30 : vector<8x128xf32>
    %c0_16 = arith.constant 0 : index
    %c0_17 = arith.constant 0 : index
    %c0_18 = arith.constant 0 : index
    %36 = vector.load %arg3[%c0_16, %c0_17, %c0_18] : memref<2x8x128xf32, #tpu.memory_space<vmem>>, vector<1x8x128xf32>
    %37 = vector.shape_cast %36 : vector<1x8x128xf32> to vector<8x128xf32>
    %38 = vector.shape_cast %35 : vector<8x128xf32> to vector<1x8x128xf32>
    tpu.vector_store %arg3[%c0_16, %c0_17, %c0_18], %38 {strides = array<i32>} : memref<2x8x128xf32, #tpu.memory_space<vmem>>, vector<1x8x128xf32>,
    return
  }
  func.func @transform_0(%arg0: i32) -> i32 {
    %c0_i32 = arith.constant 0 : i32
    %c0_i32_0 = arith.constant 0 : i32
    return %c0_i32 : i32
  }
  func.func @transform_1(%arg0: i32) -> (i32, i32, i32) {
    %c0_i32 = arith.constant 0 : i32
    %c0_i32_0 = arith.constant 0 : i32
    %c0_i32_1 = arith.constant 0 : i32
    return %c0_i32, %arg0, %c0_i32_0 : i32, i32, i32
  }
  func.func @transform_2(%arg0: i32) -> (i32, i32, i32) {
    %c0_i32 = arith.constant 0 : i32
    %c0_i32_0 = arith.constant 0 : i32
    %c0_i32_1 = arith.constant 0 : i32
    return %c0_i32, %arg0, %c0_i32_0 : i32, i32, i32
  }
}

</mosaic_0001>

<llo_original>
// kernel: tpu_custom_call.1
$region0: #{tpu_custom_call.1}
  #allocation0 [shape = 'u32[]', space=smem, size = 0x4, offset = 0x4, fixed_abs, tag = 'smem constant byte address 0x4 - core index']
  #allocation1 [shape = 'u32[72,128]{1,0:T(1,128)}', space=vmem, size = 0x9000, scoped, tag = 'internal scratch']
  %s0 = inlined_call_operand.hbm [shape: f32[5], index: 0, kind: input, shape index: {}]
  %s1 = inlined_call_operand.hbm [shape: f32[4,8,128], index: 1, kind: input, shape index: {}]
  %s2 = inlined_call_operand.hbm [shape: f32[2,8,128], index: 2, kind: output, shape index: {}]
  %s3 = sld [smem:[#allocation0]]
  $region26: #{tpu_custom_call.1} parent=0
    _
  %s5 = ssub.s32 1, %s3
  %s6 = scalar_select 0, %s5, %s3
  $region1: #{tpu_custom_call.1} parent=0
    #allocation2 [shape = 'u8[512]{0}', space=smem, size = 0x200, scoped, tag = 'input window, operand 0, single buffered']
    #allocation3 [shape = 's32[1]{0}', space=sflag, size = 0x4, scoped, tag = 'scoped memory for tpu_custom_call.1']
    #allocation4 [shape = 's32[1]{0}', space=sflag, size = 0x4, scoped, tag = 'scoped memory for tpu_custom_call.1']
    #allocation5 [shape = 's32[1]{0}', space=sflag, size = 0x4, scoped, tag = 'scoped memory for tpu_custom_call.1']
    #allocation6 [shape = 'u8[16384]{0}', space=vmem, size = 0x4000, scoped, tag = 'input window, operand 1, single buffered']
    #allocation7 [shape = 'u8[8192]{0}', space=vmem, size = 0x2000, scoped, tag = 'output window, operand 0, single buffered']
    %7 = vsyncpa [#allocation5], 0
    %8 = vsyncpa [#allocation3], 0
    %9 = vsyncpa [#allocation4], 0
    // Predicated region
    $region2: #{tpu_custom_call.1} parent=1 // pred_check
      _
    $region3: #{tpu_custom_call.1} parent=1 // pred_check_branch
      %11 = sbr.rel (0) target = $region5
    $region4: #{tpu_custom_call.1} parent=1 // pred_region
      %13 = vsyncadd [#allocation5], 0
      %s15 = sshll.u32 %s0, 4
      %s16 = int_to_ptr.hbm [resolvable:$true] %s15
      %18 = dma.hbm_to_smem %s16, 16, [#allocation2], [#allocation5]
    $region5: #{tpu_custom_call.1} parent=1 // pred_fallthru
      _
    // Predicated region
    $region6: #{tpu_custom_call.1} parent=1 // pred_check
      _
    $region7: #{tpu_custom_call.1} parent=1 // pred_check_branch
      %20 = sbr.rel (0) target = $region9
    $region8: #{tpu_custom_call.1} parent=1 // pred_region
      %22 = vsyncadd [#allocation3], 0
      %s23 = sshll.u32 %s1, 4
      %s24 = int_to_ptr.hbm [resolvable:$true] %s23
      %s25 = sshll.u32 [#allocation6], 4
      %s26 = int_to_ptr.vmem [resolvable:$true] %s25
      %31 = dma.hbm_to_vmem [thread:$0]  %s24, 512, %s26, [#allocation3], 128, 128, 8
    $region9: #{tpu_custom_call.1} parent=1 // pred_fallthru
      _
    // Predicated region
    $region10: #{tpu_custom_call.1} parent=1 // pred_check
      _
    $region11: #{tpu_custom_call.1} parent=1 // pred_check_branch
      %33 = sbr.rel (0) target = $region13
    $region12: #{tpu_custom_call.1} parent=1 // pred_region
      %35 = dma.done [#allocation5], 16
    $region13: #{tpu_custom_call.1} parent=1 // pred_fallthru
      _
    // Predicated region
    $region14: #{tpu_custom_call.1} parent=1 // pred_check
      _
    $region15: #{tpu_custom_call.1} parent=1 // pred_check_branch
      %37 = sbr.rel (0) target = $region17
    $region16: #{tpu_custom_call.1} parent=1 // pred_region
      %39 = dma.done [#allocation3], 512
    $region17: #{tpu_custom_call.1} parent=1 // pred_fallthru
      _
    %40 = sfence
    %v41 = vld [vmem:[#allocation6] sm:$0xff]
    %s42 = sld [smem:[#allocation2]]
    %v43 = vstv %s42
    %v44 = vmul.f32 %v41, %v43
    %s45 = scalar_lea.vmem [#allocation6], 8
    %v46 = vld [vmem:[%s45] sm:$0xff]
    %s47 = sld [smem:[#allocation2 + $0x1]]
    %v48 = vstv %s47
    %v49 = vmul.f32 %v46, %v48
    %v50 = vadd.f32 %v44, %v49
    %s51 = scalar_lea.vmem [#allocation6], 16
    %v52 = vld [vmem:[%s51] sm:$0xff]
    %s53 = sld [smem:[#allocation2 + $0x2]]
    %v54 = vstv %s53
    %v55 = vmul.f32 %v52, %v54
    %v56 = vadd.f32 %v50, %v55
    %s57 = scalar_lea.vmem [#allocation6], 24
    %v58 = vld [vmem:[%s57] sm:$0xff]
    %s59 = sld [smem:[#allocation2 + $0x3]]
    %v60 = vstv %s59
    %v61 = vmul.f32 %v58, %v60
    %v62 = vadd.f32 %v56, %v61
    %s63 = sld [smem:[#allocation2 + $0x4]]
    %v64 = vstv %s63
    %v65 = vadd.f32 %v62, %v64
    %v66 = vxor.u32 %v65, 2147483648
    %v67 = vmul.f32 %v66, 1.442695
    %v68 = vpow.pop %v67
    %v69 = vadd.f32 %v68, 1.0
    %v70 = vrcp.pop %v69
    %v71 = vmul.f32 %v69, %v70
    %v72 = vsub.f32 1.0, %v71
    %v73 = vmul.f32 %v70, %v72
    %v74 = vadd.f32 %v70, %v73
    %vm75 = vweird.f32 %v69
    %vm76 = vweird.f32 %v70
    %vm77 = vmor %vm75, %vm76
    %v78 = vsel %vm77, %v70, %v74
    %v79 = vand.u32 2147483647, %v69
    %vm80 = vcmp.eq.f32.partialorder %v79, 8.507059e+37
    %v81 = vand.u32 %v69, 2147483648
    %v82 = vor.u32 1.1754944e-38, %v81
    %v83 = vsel %vm80, %v82, %v78
    %v84 = vmul.f32 1.0, %v83
    %s85 = scalar_lea.vmem [#allocation7], 8
    %86 = vst [vmem:[%s85] sm:$0xff] %v84
    %v87 = vsub.f32 1.0, %v84
    %88 = vst [vmem:[#allocation7] sm:$0xff] %v87
    // Predicated region
    $region18: #{tpu_custom_call.1} parent=1 // pred_check
      _
    $region19: #{tpu_custom_call.1} parent=1 // pred_check_branch
      %90 = sbr.rel (0) target = $region21
    $region20: #{tpu_custom_call.1} parent=1 // pred_region
      %92 = vsyncadd [#allocation4], 0
      %s93 = sshll.u32 [#allocation7], 4
      %s94 = int_to_ptr.vmem [resolvable:$true] %s93
      %s95 = sshll.u32 %s2, 4
      %s96 = int_to_ptr.hbm [resolvable:$true] %s95
      %101 = dma.vmem_to_hbm [thread:$0]  %s94, 256, %s96, [#allocation4], 128, 128, 8
    $region21: #{tpu_custom_call.1} parent=1 // pred_fallthru
      _
    // Predicated region
    $region22: #{tpu_custom_call.1} parent=1 // pred_check
      _
    $region23: #{tpu_custom_call.1} parent=1 // pred_check_branch
      %103 = sbr.rel (0) target = $region25
    $region24: #{tpu_custom_call.1} parent=1 // pred_region
      %105 = dma.done [#allocation4], 256
    $region25: #{tpu_custom_call.1} parent=1 // pred_fallthru
      _
    %106 = vsyncpa [#allocation3], 1
    %107 = vsyncpa [#allocation4], 1
    %108 = vsyncpa [#allocation5], 1

</llo_original>
